<compile_context>
chip_gen: v7x
topology: tpu7x:2x2x1
jax: 0.10.0
libtpu: 0.0.40
codegen_flags: <defaults>
</compile_context>

<pallas_src>
import math

import jax
import jax.numpy as jnp
from jax.experimental import pallas as pl
from jax.experimental.pallas import tpu as pltpu

LANE = 128
MAX_TILE_ROWS = 8192                 # (8192, 128) f32 tile = 4 MiB per input.
VMEM_LIMIT_BYTES = 40 * 1024 * 1024  # 2 inputs x 2 buffers x 4 MiB = 16 MiB + slack.


def _make_mape_kernel(rows, block_rows, nsteps):
    """Build the fused sum kernel, specialized on static shape parameters."""
    needs_row_mask = (rows % block_rows) != 0   # last block is partial
    vreg_rows = (block_rows % 8) == 0           # (8,128)-tileable block

    def kernel(x_ref, l_ref, loss_ref, macc, racc):
        i = pl.program_id(0)

        @pl.when(i == 0)
        def _():
            macc[...] = jnp.zeros_like(macc)
            racc[...] = jnp.zeros_like(racc)

        x = x_ref[...].astype(jnp.float32)
        lbl = l_ref[...].astype(jnp.float32)

        # null_val = NaN branch: valid where labels are not NaN.
        mask = jnp.logical_not(jnp.isnan(lbl))
        if needs_row_mask:
            # Last block runs past `rows`; its OOB rows hold garbage -> mask out.
            row_ids = (jax.lax.broadcasted_iota(jnp.int32, x.shape, 0)
                       + i * block_rows)
            mask = jnp.logical_and(mask, row_ids < rows)

        raw = jnp.abs(x - lbl) / lbl
        # One select reproduces both the reference's mask multiply and its
        # NaN->0 scrub (x == NaN, or 0/0 when x == labels == 0).  Non-NaN
        # labels == 0 still yield inf, exactly like the PyTorch reference.
        good = jnp.logical_and(mask, jnp.logical_not(jnp.isnan(raw)))
        term = jnp.where(good, raw, 0.0)
        maskf = mask.astype(jnp.float32)

        if vreg_rows:
            # Full-vreg (8,128) accumulators: vreg-wise VALU adds only.
            macc[...] += maskf.reshape(-1, 8, LANE).sum(axis=0)
            racc[...] += term.reshape(-1, 8, LANE).sum(axis=0)
        else:
            # Tiny inputs only (rows < 8 rows, single block).
            macc[0:1, :] += jnp.sum(maskf, axis=0, keepdims=True)
            racc[0:1, :] += jnp.sum(term, axis=0, keepdims=True)

        @pl.when(i == nsteps - 1)
        def _():
            # In-kernel epilogue: final cross-sublane/lane reduce + guarded
            # divide, emitted as a single (1,1) scalar.
            sum_mask = jnp.sum(macc[...], keepdims=True)   # (1, 1)
            sum_raw = jnp.sum(racc[...], keepdims=True)    # (1, 1)
            # mean(loss) = sum_raw / sum_mask; all-NaN labels -> 0.  The safe
            # denominator keeps the unselected branch NaN-free.
            loss_ref[...] = jnp.where(sum_mask > 0.0,
                                      sum_raw / jnp.maximum(sum_mask, 1.0),
                                      jnp.zeros_like(sum_raw))

    return kernel


def _prepare(x, labels):
    """Flatten to (rows, 128); pad only a <=127-element tail when needed."""
    n = x.size
    rows = pl.cdiv(n, LANE)
    pad = rows * LANE - n
    x_flat = jnp.ravel(x)
    l_flat = jnp.ravel(labels)
    if pad:
        # Only when size % 128 != 0 (not the NCHW example).  Padded labels are
        # NaN -> mask 0, term 0: no effect on either sum.
        x_flat = jnp.pad(x_flat, (0, pad))
        l_flat = jnp.pad(l_flat, (0, pad), constant_values=jnp.nan)
    block_rows = rows if rows <= MAX_TILE_ROWS else MAX_TILE_ROWS
    return x_flat.reshape(rows, LANE), l_flat.reshape(rows, LANE), rows, block_rows


@jax.jit
def mape_pallas(x, labels):
    """MAPE.forward with null_val=NaN (the default branch)."""
    # TODO(synk): the non-NaN null_val branch (mask = labels != null_val) is
    # not wired up; only the default null_val=NaN semantics are implemented.
    # TODO(synk): on v7x, shard the row-block axis across the 2 TensorCores
    # (leading "parallel" grid axis + per-core accumulator slab) for ~2x at
    # very large N; kept single-axis here for the small-loss-tensor use case.
    x2, l2, rows, block_rows = _prepare(x, labels)
    nsteps = pl.cdiv(rows, block_rows)
    kernel = _make_mape_kernel(rows, block_rows, nsteps)

    tile_spec = pl.BlockSpec((block_rows, LANE), lambda i: (i, 0))
    loss = pl.pallas_call(
        kernel,
        out_shape=jax.ShapeDtypeStruct((1, 1), jnp.float32),
        grid=(nsteps,),
        in_specs=[tile_spec, tile_spec],
        out_specs=pl.BlockSpec((1, 1), lambda i: (0, 0)),
        scratch_shapes=[pltpu.VMEM((8, LANE), jnp.float32),
                        pltpu.VMEM((8, LANE), jnp.float32)],
        compiler_params=pltpu.CompilerParams(
            dimension_semantics=("arbitrary",),
            vmem_limit_bytes=VMEM_LIMIT_BYTES),
    )(x2, l2)
    return loss[0, 0]


def mape_reference(x, labels):
    """Pure-JAX mirror of the PyTorch forward (null_val=NaN branch)."""
    x = x.astype(jnp.float32)
    labels = labels.astype(jnp.float32)
    mask = jnp.logical_not(jnp.isnan(labels)).astype(jnp.float32)
    mask = mask / jnp.mean(mask)
    mask = jnp.where(jnp.isnan(mask), jnp.zeros_like(mask), mask)
    loss = jnp.abs((x - labels) / labels)
    loss = loss * mask
    loss = jnp.where(jnp.isnan(loss), jnp.zeros_like(loss), loss)
    return jnp.mean(loss)


if __name__ == "__main__":
    key = jax.random.PRNGKey(0)
    kx, kl = jax.random.split(key)
    # NCHW-shaped predictions / labels; labels > 0 as the docstring assumes.
    x = jax.random.uniform(kx, (2, 4, 16, 16), jnp.float32, 0.0, 5.0)
    labels = jax.random.uniform(kl, (2, 4, 16, 16), jnp.float32, 0.5, 5.0)
    # Exercise the NaN-mask (null_val=NaN) path on a few elements.
    labels = labels.at[0, 0, 0, :5].set(jnp.nan)

    out = jax.block_until_ready(mape_pallas(x, labels))

    ref = mape_reference(x, labels)
    assert jnp.allclose(out, ref, rtol=1e-5, atol=1e-6), (out, ref)
    assert not math.isnan(float(out))
    print("KERNEL_OK")
</pallas_src>

<mosaic_0001>
module attributes {stable_mosaic.version = 11 : i64} {
  func.func @kernel(%arg0: i32, %arg1: memref<16x128xf32, #tpu.memory_space<vmem>>, %arg2: memref<16x128xf32, #tpu.memory_space<vmem>>, %arg3: memref<1x1xf32, #tpu.memory_space<vmem>>, %arg4: memref<8x128xf32, #tpu.memory_space<vmem>>, %arg5: memref<8x128xf32, #tpu.memory_space<vmem>>) attributes {dimension_semantics = [#tpu.dimension_semantics<arbitrary>], iteration_bounds = array<i64: 1>, scalar_prefetch = 0 : i64, scratch_operands = 2 : i64, tpu.core_type = #tpu.core_type<tc>, window_params = [{transform_indices = @transform_0, window_bounds = array<i64: 16, 128>}, {transform_indices = @transform_1, window_bounds = array<i64: 16, 128>}, {pipeline_mode = #tpu.pipeline_mode<synchronous>, transform_indices = @transform_2, window_bounds = array<i64: 1, 1>}]} {
    %c0_i32 = arith.constant 0 : i32
    %0 = arith.cmpi eq, %arg0, %c0_i32 : i32
    %1 = arith.extui %0 : i1 to i32
    %c0_i32_0 = arith.constant 0 : i32
    %2 = arith.cmpi ne, %1, %c0_i32_0 : i32
    scf.if %2 {
      %cst_18 = arith.constant 0.000000e+00 : f32
      %30 = vector.broadcast %cst_18 : f32 to vector<8x128xf32>
      %c0_19 = arith.constant 0 : index
      %c0_20 = arith.constant 0 : index
      %31 = vector.load %arg4[%c0_19, %c0_20] : memref<8x128xf32, #tpu.memory_space<vmem>>, vector<8x128xf32>
      tpu.vector_store %arg4[%c0_19, %c0_20], %30 {strides = array<i32>} : memref<8x128xf32, #tpu.memory_space<vmem>>, vector<8x128xf32>,
      %cst_21 = arith.constant 0.000000e+00 : f32
      %32 = vector.broadcast %cst_21 : f32 to vector<8x128xf32>
      %c0_22 = arith.constant 0 : index
      %c0_23 = arith.constant 0 : index
      %33 = vector.load %arg5[%c0_22, %c0_23] : memref<8x128xf32, #tpu.memory_space<vmem>>, vector<8x128xf32>
      tpu.vector_store %arg5[%c0_22, %c0_23], %32 {strides = array<i32>} : memref<8x128xf32, #tpu.memory_space<vmem>>, vector<8x128xf32>,
    } else {
    }
    %c0 = arith.constant 0 : index
    %c0_1 = arith.constant 0 : index
    %3 = vector.load %arg1[%c0, %c0_1] : memref<16x128xf32, #tpu.memory_space<vmem>>, vector<16x128xf32>
    %c0_2 = arith.constant 0 : index
    %c0_3 = arith.constant 0 : index
    %4 = vector.load %arg2[%c0_2, %c0_3] : memref<16x128xf32, #tpu.memory_space<vmem>>, vector<16x128xf32>
    %5 = arith.cmpf one, %4, %4 : vector<16x128xf32>
    %cst = arith.constant dense<true> : vector<16x128xi1>
    %6 = arith.xori %5, %cst : vector<16x128xi1>
    %7 = arith.subf %3, %4 : vector<16x128xf32>
    %8 = math.absf %7 : vector<16x128xf32>
    %9 = arith.divf %8, %4 : vector<16x128xf32>
    %10 = arith.cmpf one, %9, %9 : vector<16x128xf32>
    %cst_4 = arith.constant dense<true> : vector<16x128xi1>
    %11 = arith.xori %10, %cst_4 : vector<16x128xi1>
    %12 = arith.andi %6, %11 : vector<16x128xi1>
    %cst_5 = arith.constant 0.000000e+00 : f32
    %13 = vector.broadcast %cst_5 : f32 to vector<16x128xf32>
    %14 = arith.select %12, %9, %13 : vector<16x128xi1>, vector<16x128xf32>
    %15 = arith.extui %6 : vector<16x128xi1> to vector<16x128xi32>
    %16 = arith.sitofp %15 : vector<16x128xi32> to vector<16x128xf32>
    %c0_6 = arith.constant 0 : index
    %c0_7 = arith.constant 0 : index
    %17 = vector.load %arg4[%c0_6, %c0_7] : memref<8x128xf32, #tpu.memory_space<vmem>>, vector<8x128xf32>
    %18 = vector.shape_cast %16 : vector<16x128xf32> to vector<2x8x128xf32>
    %cst_8 = arith.constant dense<0.000000e+00> : vector<8x128xf32>
    %19 = vector.multi_reduction <add>, %18, %cst_8 [0] : vector<2x8x128xf32> to vector<8x128xf32>
    %20 = arith.addf %17, %19 : vector<8x128xf32>
    %c0_9 = arith.constant 0 : index
    %c0_10 = arith.constant 0 : index
    %21 = vector.load %arg4[%c0_9, %c0_10] : memref<8x128xf32, #tpu.memory_space<vmem>>, vector<8x128xf32>
    tpu.vector_store %arg4[%c0_9, %c0_10], %20 {strides = array<i32>} : memref<8x128xf32, #tpu.memory_space<vmem>>, vector<8x128xf32>,
    %c0_11 = arith.constant 0 : index
    %c0_12 = arith.constant 0 : index
    %22 = vector.load %arg5[%c0_11, %c0_12] : memref<8x128xf32, #tpu.memory_space<vmem>>, vector<8x128xf32>
    %23 = vector.shape_cast %14 : vector<16x128xf32> to vector<2x8x128xf32>
    %cst_13 = arith.constant dense<0.000000e+00> : vector<8x128xf32>
    %24 = vector.multi_reduction <add>, %23, %cst_13 [0] : vector<2x8x128xf32> to vector<8x128xf32>
    %25 = arith.addf %22, %24 : vector<8x128xf32>
    %c0_14 = arith.constant 0 : index
    %c0_15 = arith.constant 0 : index
    %26 = vector.load %arg5[%c0_14, %c0_15] : memref<8x128xf32, #tpu.memory_space<vmem>>, vector<8x128xf32>
    tpu.vector_store %arg5[%c0_14, %c0_15], %25 {strides = array<i32>} : memref<8x128xf32, #tpu.memory_space<vmem>>, vector<8x128xf32>,
    %c0_i32_16 = arith.constant 0 : i32
    %27 = arith.cmpi eq, %arg0, %c0_i32_16 : i32
    %28 = arith.extui %27 : i1 to i32
    %c0_i32_17 = arith.constant 0 : i32
    %29 = arith.cmpi ne, %28, %c0_i32_17 : i32
    scf.if %29 {
      %c0_18 = arith.constant 0 : index
      %c0_19 = arith.constant 0 : index
      %30 = vector.load %arg4[%c0_18, %c0_19] : memref<8x128xf32, #tpu.memory_space<vmem>>, vector<8x128xf32>
      %31 = vector.shape_cast %30 : vector<8x128xf32> to vector<1x8x128xf32>
      %cst_20 = arith.constant dense<0.000000e+00> : vector<1xf32>
      %32 = vector.multi_reduction <add>, %31, %cst_20 [1, 2] : vector<1x8x128xf32> to vector<1xf32>
      %33 = vector.shape_cast %32 : vector<1xf32> to vector<1x1x1xf32>
      %34 = vector.extract %33[0, 0, 0] : f32 from vector<1x1x1xf32>
      %35 = vector.broadcast %34 : f32 to vector<1x1xf32>
      %c0_21 = arith.constant 0 : index
      %c0_22 = arith.constant 0 : index
      %36 = vector.load %arg5[%c0_21, %c0_22] : memref<8x128xf32, #tpu.memory_space<vmem>>, vector<8x128xf32>
      %37 = vector.shape_cast %36 : vector<8x128xf32> to vector<1x8x128xf32>
      %cst_23 = arith.constant dense<0.000000e+00> : vector<1xf32>
      %38 = vector.multi_reduction <add>, %37, %cst_23 [1, 2] : vector<1x8x128xf32> to vector<1xf32>
      %39 = vector.shape_cast %38 : vector<1xf32> to vector<1x1x1xf32>
      %40 = vector.extract %39[0, 0, 0] : f32 from vector<1x1x1xf32>
      %41 = vector.broadcast %40 : f32 to vector<1x1xf32>
      %cst_24 = arith.constant 0.000000e+00 : f32
      %42 = vector.broadcast %cst_24 : f32 to vector<1x1xf32>
      %43 = arith.cmpf ogt, %35, %42 : vector<1x1xf32>
      %cst_25 = arith.constant 1.000000e+00 : f32
      %44 = vector.broadcast %cst_25 : f32 to vector<1x1xf32>
      %45 = arith.maximumf %35, %44 : vector<1x1xf32>
      %46 = arith.divf %41, %45 : vector<1x1xf32>
      %cst_26 = arith.constant 0.000000e+00 : f32
      %47 = vector.broadcast %cst_26 : f32 to vector<1x1xf32>
      %48 = arith.select %43, %46, %47 : vector<1x1xi1>, vector<1x1xf32>
      %c0_27 = arith.constant 0 : index
      %c0_28 = arith.constant 0 : index
      %49 = vector.load %arg3[%c0_27, %c0_28] : memref<1x1xf32, #tpu.memory_space<vmem>>, vector<1x1xf32>
      tpu.vector_store %arg3[%c0_27, %c0_28], %48 {strides = array<i32>} : memref<1x1xf32, #tpu.memory_space<vmem>>, vector<1x1xf32>,
    } else {
    }
    return
  }
  func.func @transform_0(%arg0: i32) -> (i32, i32) {
    %c0_i32 = arith.constant 0 : i32
    %c0_i32_0 = arith.constant 0 : i32
    return %arg0, %c0_i32 : i32, i32
  }
  func.func @transform_1(%arg0: i32) -> (i32, i32) {
    %c0_i32 = arith.constant 0 : i32
    %c0_i32_0 = arith.constant 0 : i32
    return %arg0, %c0_i32 : i32, i32
  }
  func.func @transform_2(%arg0: i32) -> (i32, i32) {
    %c0_i32 = arith.constant 0 : i32
    %c0_i32_0 = arith.constant 0 : i32
    %c0_i32_1 = arith.constant 0 : i32
    return %c0_i32, %c0_i32_0 : i32, i32
  }
}

</mosaic_0001>

<llo_original>
// kernel: mape_pallas.1
$region0: #{mape_pallas.1}
  #allocation0 [shape = 'u32[]', space=smem, size = 0x4, offset = 0x4, fixed_abs, tag = 'smem constant byte address 0x4 - core index']
  #allocation1 [shape = 'u32[144,128]{1,0:T(1,128)}', space=vmem, size = 0x12000, scoped, tag = 'internal scratch']
  #allocation2 [shape = 'f32[8,128]{1,0:T(8,128)}', space=vmem, size = 0x1000, scoped, tag = 'scratch operand']
  #allocation3 [shape = 'f32[8,128]{1,0:T(8,128)}', space=vmem, size = 0x1000, scoped, tag = 'scratch operand']
  %s0 = inlined_call_operand.vmem [shape: f32[16,128], index: 0, kind: input, shape index: {}]
  %s1 = inlined_call_operand.vmem [shape: f32[16,128], index: 1, kind: input, shape index: {}]
  %s2 = inlined_call_operand.hbm [shape: f32[1,1], index: 2, kind: output, shape index: {}]
  %s3 = sld [smem:[#allocation0]]
  $region26: #{mape_pallas.1} parent=0
    _
  %s5 = ssub.s32 1, %s3
  %s6 = scalar_select 0, %s5, %s3
  $region1: #{mape_pallas.1} parent=0
    #allocation4 [shape = 'u8[512]{0}', space=vmem, size = 0x400, scoped, tag = 'output window, operand 0, single buffered']
    #allocation5 [shape = 's32[1]{0}', space=sflag, size = 0x4, scoped, tag = 'scoped memory for mape_pallas.1']
    %7 = vsyncpa [#allocation5], 0
    // Predicated region
    $region2: #{mape_pallas.1} parent=1 // pred_check
      _
    $region3: #{mape_pallas.1} parent=1 // pred_check_branch
      %9 = sbr.rel (0) target = $region5
    $region4: #{mape_pallas.1} parent=1 // pred_region
      _
    $region5: #{mape_pallas.1} parent=1 // pred_fallthru
      _
    // Predicated region
    $region6: #{mape_pallas.1} parent=1 // pred_check
      _
    $region7: #{mape_pallas.1} parent=1 // pred_check_branch
      %11 = sbr.rel (0) target = $region9
    $region8: #{mape_pallas.1} parent=1 // pred_region
      _
    $region9: #{mape_pallas.1} parent=1 // pred_fallthru
      _
    %p12 = scmp.eq.s32.totalorder 0, 0
    // Predicated region
    $region10: #{mape_pallas.1} parent=1 // pred_check
      %p13 = pneg %p12
    $region11: #{mape_pallas.1} parent=1 // pred_check_branch
      %15 = sbr.rel (%p13) target = $region13
    $region12: #{mape_pallas.1} parent=1 // pred_region
      %16 = vst [vmem:[#allocation2] sm:$0xff] 0.0
      %17 = vst [vmem:[#allocation3] sm:$0xff] 0.0
    $region13: #{mape_pallas.1} parent=1 // pred_fallthru
      _
    %v18 = vld [vmem:[%s0] sm:$0xff]
    %v19 = vld [vmem:[%s0 + $0x8] sm:$0xff]
    %v20 = vld [vmem:[%s1] sm:$0xff]
    %v21 = vld [vmem:[%s1 + $0x8] sm:$0xff]
    %vm22 = vcmp.ne.f32.partialorder %v20, %v20
    %vm23 = vcmp.ne.f32.partialorder %v21, %v21
    %vm24 = vmxor %vm22, 1
    %vm25 = vmxor %vm23, 1
    %v26 = vsub.f32 %v18, %v20
    %v27 = vsub.f32 %v19, %v21
    %v28 = vand.u32 2147483647, %v26
    %v29 = vand.u32 2147483647, %v27
    %v30 = vrcp.pop %v20
    %v31 = vmul.f32 %v28, %v30
    %v32 = vrcp.pop %v21
    %v33 = vmul.f32 %v29, %v32
    %vm34 = vcmp.ne.f32.partialorder %v31, %v31
    %vm35 = vcmp.ne.f32.partialorder %v33, %v33
    %vm36 = vmxor %vm34, 1
    %vm37 = vmxor %vm35, 1
    %vm38 = vmand %vm24, %vm36
    %vm39 = vmand %vm25, %vm37
    %v40 = vsel %vm38, %v31, 0.0
    %v41 = vsel %vm39, %v33, 0.0
    %v42 = vsel %vm24, 1, 0
    %v43 = vsel %vm25, 1, 0
    %v44 = vcvt.s32.f32 %v42
    %v45 = vcvt.s32.f32 %v43
    %v46 = vld [vmem:[#allocation2] sm:$0xff]
    %v47 = vadd.f32 %v44, %v45
    %v48 = vadd.f32 %v46, %v47
    %49 = vst [vmem:[#allocation2] sm:$0xff] %v48
    %v50 = vld [vmem:[#allocation3] sm:$0xff]
    %v51 = vadd.f32 %v40, %v41
    %v52 = vadd.f32 %v50, %v51
    %53 = vst [vmem:[#allocation3] sm:$0xff] %v52
    // Predicated region
    $region14: #{mape_pallas.1} parent=1 // pred_check
      %p54 = pneg %p12
    $region15: #{mape_pallas.1} parent=1 // pred_check_branch
      %56 = sbr.rel (%p54) target = $region17
    $region16: #{mape_pallas.1} parent=1 // pred_region
      %v57 = vld [vmem:[#allocation2] sm:$0xff]
      %58 = vadd.xlane.f32.xlu0 %v57
      %v59 = vpop.xlane.xlu0 %58
      %v60 = vrot.slane %v59, 4
      %v61 = vadd.f32 %v59, %v60
      %v62 = vrot.slane %v61, 2
      %v63 = vadd.f32 %v61, %v62
      %v64 = vrot.slane %v63, 1
      %v65 = vadd.f32 %v63, %v64
      %s66 = vtos %v65
      %v67 = vstv %s66
      %v68 = vld [vmem:[#allocation3] sm:$0xff]
      %69 = vadd.xlane.f32.xlu0 %v68
      %v70 = vpop.xlane.xlu0 %69
      %v71 = vrot.slane %v70, 4
      %v72 = vadd.f32 %v70, %v71
      %v73 = vrot.slane %v72, 2
      %v74 = vadd.f32 %v72, %v73
      %v75 = vrot.slane %v74, 1
      %v76 = vadd.f32 %v74, %v75
      %s77 = vtos %v76
      %v78 = vstv %s77
      %vm79 = vcmp.gt.f32.partialorder %v67, 0.0
      %v80 = vmax.f32 %v67, 1.0
      %v81 = vrcp.pop %v80
      %v82 = vmul.f32 %v78, %v81
      %v83 = vsel %vm79, %v82, 0.0
      %vm84 = vcmask 0
      %85 = vst.msk [vmem:[#allocation4] sm:$0x1] %vm84, %v83
    $region17: #{mape_pallas.1} parent=1 // pred_fallthru
      _
    // Predicated region
    $region18: #{mape_pallas.1} parent=1 // pred_check
      _
    $region19: #{mape_pallas.1} parent=1 // pred_check_branch
      %87 = sbr.rel (0) target = $region21
    $region20: #{mape_pallas.1} parent=1 // pred_region
      %s89 = ssub.s32 16, 16
      %90 = vsyncadd [#allocation5], %s89
      %s92 = sshll.u32 [#allocation4], 4
      %s93 = int_to_ptr.vmem [resolvable:$true] %s92
      %95 = dma.vmem_to_hbm [thread:$0]  %s93, 16, %s2, [#allocation5]
    $region21: #{mape_pallas.1} parent=1 // pred_fallthru
      _
    // Predicated region
    $region22: #{mape_pallas.1} parent=1 // pred_check
      _
    $region23: #{mape_pallas.1} parent=1 // pred_check_branch
      %97 = sbr.rel (0) target = $region25
    $region24: #{mape_pallas.1} parent=1 // pred_region
      %98 = dma.done [#allocation5], 16
    $region25: #{mape_pallas.1} parent=1 // pred_fallthru
      _
    %99 = vsyncpa [#allocation5], 1

</llo_original>
